<compile_context>
chip_gen: v7x
topology: tpu7x:2x2x1
jax: 0.10.0
libtpu: 0.0.40
codegen_flags: <defaults>
</compile_context>

<pallas_src>
import functools

import jax
import jax.numpy as jnp
from jax.experimental import pallas as pl
from jax.experimental.pallas import tpu as pltpu


def _time_encoder_kernel(t_ref, w1_ref, b1_ref, w2_ref, b2_ref, o_ref, *, W):
    # t_ref  : SMEM (B, 1) f32 (all timesteps; indexed by grid batch id)
    # w1_ref : (C2, 1)   b1_ref: (C2, 1)   -- first Linear, stored transposed
    # w2_ref : (C2, C)   b2_ref: (1, C)
    # o_ref  : (TILE_H, W*C) lane-dense output tile for (batch b, row-block hh)
    b = pl.program_id(0)
    t_b = t_ref[b, 0]                                            # scalar f32

    # Linear(1, C2) + ReLU: degenerate K=1 matmul == scalar splat * weights (VPU)
    h1 = jnp.maximum(t_b * w1_ref[...] + b1_ref[...], 0.0)       # (C2, 1)

    # Linear(C2, C) on the VPU/XLU: broadcast-multiply then cross-sublane sum.
    out_row = jnp.sum(h1 * w2_ref[...], axis=0, keepdims=True) + b2_ref[...]  # (1, C)

    # Build one lane-dense replicated row of width W*C, broadcast over the
    # TILE_H sublanes, store.  This is the only data this step materializes.
    tile_h, wc = o_ref.shape
    row = jnp.tile(out_row, (1, W))                              # (1, W*C)
    o_ref[...] = jnp.broadcast_to(row, (tile_h, wc))


def _pick_tile_h(H):
    """Largest convenient row-tile that satisfies the (8,128) block rule."""
    if H % 8 != 0:
        return H                      # full-dim block sidesteps the rule
    for cand in (128, 64, 32, 16, 8):
        if H % cand == 0:
            return cand
    return 8


def time_encoder(t, w1, b1, w2, b2, h, w):
    """t: (B, 1) f32 -> (B, h, w, C) f32 (matches .view(B,1,1,C).repeat(1,h,w,1))."""
    B = t.shape[0]
    C2, C = w2.shape
    H, W = h, w
    WC = W * C
    TILE_H = _pick_tile_h(H)

    # Trivial wrapper-side layout plumbing (XLA ops, outside the kernel).
    w1_t = w1.reshape(1, C2).T                    # (C2, 1)
    b1_t = b1.reshape(1, C2).T                    # (C2, 1)
    b2_r = b2.reshape(1, C)

    const = lambda b, hh: (0, 0)                  # weights are grid-invariant

    out = pl.pallas_call(
        functools.partial(_time_encoder_kernel, W=W),
        out_shape=jax.ShapeDtypeStruct((B, H, WC), jnp.float32),
        grid=(B, H // TILE_H),
        in_specs=[
            pl.BlockSpec(memory_space=pltpu.MemorySpace.SMEM),   # t (scalars)
            pl.BlockSpec((C2, 1), const),                        # w1^T
            pl.BlockSpec((C2, 1), const),                        # b1^T
            pl.BlockSpec((C2, C), const),                        # w2
            pl.BlockSpec((1, C), const),                         # b2
        ],
        out_specs=pl.BlockSpec((None, TILE_H, WC), lambda b, hh: (b, hh, 0)),
        compiler_params=pltpu.CompilerParams(
            dimension_semantics=("parallel", "parallel")),
    )(t, w1_t, b1_t, w2, b2_r)

    return out.reshape(B, H, W, C)


def init_params(key, C):
    """Deterministic init matching PyTorch Linear defaults (U(-1/sqrt(fan_in), +))."""
    C2 = C // 2
    k1, k2, k3, k4 = jax.random.split(key, 4)
    bound1 = 1.0 / jnp.sqrt(1.0)           # fan_in = 1
    bound2 = 1.0 / jnp.sqrt(float(C2))
    w1 = jax.random.uniform(k1, (1, C2), jnp.float32, -bound1, bound1)
    b1 = jax.random.uniform(k2, (1, C2), jnp.float32, -bound1, bound1)
    w2 = jax.random.uniform(k3, (C2, C), jnp.float32, -bound2, bound2)
    b2 = jax.random.uniform(k4, (1, C), jnp.float32, -bound2, bound2)
    return w1, b1, w2, b2


def time_encoder_ref(t, w1, b1, w2, b2, h, w):
    """Pure-JAX reference mirroring the PyTorch forward."""
    h1 = jnp.maximum(t @ w1 + b1, 0.0)
    out = h1 @ w2 + b2                                           # (B, C)
    B, C = out.shape
    return jnp.broadcast_to(out[:, None, None, :], (B, h, w, C))


if __name__ == "__main__":
    C = 32
    B, H, W = 2, 16, 16

    key = jax.random.PRNGKey(0)
    k_t, k_p = jax.random.split(key)
    t = jax.random.uniform(k_t, (B, 1), jnp.float32)             # timestep scalars
    w1, b1, w2, b2 = init_params(k_p, C)

    out = time_encoder(t, w1, b1, w2, b2, H, W)
    out = jax.block_until_ready(out)

    ref = time_encoder_ref(t, w1, b1, w2, b2, H, W)
    assert out.shape == (B, H, W, C), out.shape
    assert jnp.allclose(out, ref, atol=1e-5, rtol=1e-5), "mismatch vs reference"

    print("KERNEL_OK")
</pallas_src>

<mosaic_0001>
module attributes {stable_mosaic.version = 11 : i64} {
  func.func @_time_encoder_kernel(%arg0: i32, %arg1: i32, %arg2: memref<2x1xf32, #tpu.memory_space<smem>>, %arg3: memref<16x1xf32, #tpu.memory_space<vmem>>, %arg4: memref<16x1xf32, #tpu.memory_space<vmem>>, %arg5: memref<16x32xf32, #tpu.memory_space<vmem>>, %arg6: memref<1x32xf32, #tpu.memory_space<vmem>>, %arg7: memref<1x16x512xf32, #tpu.memory_space<vmem>>) attributes {dimension_semantics = [#tpu.dimension_semantics<parallel>, #tpu.dimension_semantics<parallel>], iteration_bounds = array<i64: 2, 1>, scalar_prefetch = 0 : i64, scratch_operands = 0 : i64, tpu.core_type = #tpu.core_type<tc>, window_params = [{transform_indices = @transform_0, window_bounds = array<i64: 2, 1>}, {pipeline_mode = #tpu.pipeline_mode<synchronous>, transform_indices = @transform_1, window_bounds = array<i64: 16, 1>}, {pipeline_mode = #tpu.pipeline_mode<synchronous>, transform_indices = @transform_2, window_bounds = array<i64: 16, 1>}, {pipeline_mode = #tpu.pipeline_mode<synchronous>, transform_indices = @transform_3, window_bounds = array<i64: 16, 32>}, {pipeline_mode = #tpu.pipeline_mode<synchronous>, transform_indices = @transform_4, window_bounds = array<i64: 1, 32>}, {transform_indices = @transform_5, window_bounds = array<i64: 1, 16, 512>}]} {
    %0 = arith.index_cast %arg0 : i32 to index
    %c0 = arith.constant 0 : index
    %1 = memref.load %arg2[%0, %c0] : memref<2x1xf32, #tpu.memory_space<smem>>
    %c0_0 = arith.constant 0 : index
    %c0_1 = arith.constant 0 : index
    %2 = vector.load %arg3[%c0_0, %c0_1] : memref<16x1xf32, #tpu.memory_space<vmem>>, vector<16x1xf32>
    %3 = vector.broadcast %1 : f32 to vector<16x1xf32>
    %4 = arith.mulf %3, %2 : vector<16x1xf32>
    %c0_2 = arith.constant 0 : index
    %c0_3 = arith.constant 0 : index
    %5 = vector.load %arg4[%c0_2, %c0_3] : memref<16x1xf32, #tpu.memory_space<vmem>>, vector<16x1xf32>
    %6 = arith.addf %4, %5 : vector<16x1xf32>
    %cst = arith.constant 0.000000e+00 : f32
    %7 = vector.broadcast %cst : f32 to vector<16x1xf32>
    %8 = arith.maximumf %6, %7 : vector<16x1xf32>
    %c0_4 = arith.constant 0 : index
    %c0_5 = arith.constant 0 : index
    %9 = vector.load %arg5[%c0_4, %c0_5] : memref<16x32xf32, #tpu.memory_space<vmem>>, vector<16x32xf32>
    %10 = vector.broadcast %8 : vector<16x1xf32> to vector<16x32xf32>
    %11 = arith.mulf %10, %9 : vector<16x32xf32>
    %cst_6 = arith.constant dense<0.000000e+00> : vector<32xf32>
    %12 = vector.multi_reduction <add>, %11, %cst_6 [0] : vector<16x32xf32> to vector<32xf32>
    %13 = vector.shape_cast %12 : vector<32xf32> to vector<1x32xf32>
    %c0_7 = arith.constant 0 : index
    %c0_8 = arith.constant 0 : index
    %14 = vector.load %arg6[%c0_7, %c0_8] : memref<1x32xf32, #tpu.memory_space<vmem>>, vector<1x32xf32>
    %15 = arith.addf %13, %14 : vector<1x32xf32>
    %16 = tpu.concatenate %15, %15, %15, %15, %15, %15, %15, %15, %15, %15, %15, %15, %15, %15, %15, %15 in 1 : vector<1x32xf32>, vector<1x32xf32>, vector<1x32xf32>, vector<1x32xf32>, vector<1x32xf32>, vector<1x32xf32>, vector<1x32xf32>, vector<1x32xf32>, vector<1x32xf32>, vector<1x32xf32>, vector<1x32xf32>, vector<1x32xf32>, vector<1x32xf32>, vector<1x32xf32>, vector<1x32xf32>, vector<1x32xf32> -> vector<1x512xf32>
    %17 = vector.shape_cast %16 : vector<1x512xf32> to vector<1x512xf32>
    %18 = vector.broadcast %17 : vector<1x512xf32> to vector<16x512xf32>
    %c0_9 = arith.constant 0 : index
    %c0_10 = arith.constant 0 : index
    %c0_11 = arith.constant 0 : index
    %19 = vector.load %arg7[%c0_9, %c0_10, %c0_11] : memref<1x16x512xf32, #tpu.memory_space<vmem>>, vector<1x16x512xf32>
    %20 = vector.shape_cast %19 : vector<1x16x512xf32> to vector<16x512xf32>
    %21 = vector.shape_cast %18 : vector<16x512xf32> to vector<1x16x512xf32>
    tpu.vector_store %arg7[%c0_9, %c0_10, %c0_11], %21 {strides = array<i32>} : memref<1x16x512xf32, #tpu.memory_space<vmem>>, vector<1x16x512xf32>,
    return
  }
  func.func @transform_0(%arg0: i32, %arg1: i32) -> (i32, i32) {
    %c0_i32 = arith.constant 0 : i32
    %c0_i32_0 = arith.constant 0 : i32
    %c0_i32_1 = arith.constant 0 : i32
    return %c0_i32, %c0_i32_0 : i32, i32
  }
  func.func @transform_1(%arg0: i32, %arg1: i32) -> (i32, i32) {
    %c0_i32 = arith.constant 0 : i32
    %c0_i32_0 = arith.constant 0 : i32
    %c0_i32_1 = arith.constant 0 : i32
    return %c0_i32, %c0_i32_0 : i32, i32
  }
  func.func @transform_2(%arg0: i32, %arg1: i32) -> (i32, i32) {
    %c0_i32 = arith.constant 0 : i32
    %c0_i32_0 = arith.constant 0 : i32
    %c0_i32_1 = arith.constant 0 : i32
    return %c0_i32, %c0_i32_0 : i32, i32
  }
  func.func @transform_3(%arg0: i32, %arg1: i32) -> (i32, i32) {
    %c0_i32 = arith.constant 0 : i32
    %c0_i32_0 = arith.constant 0 : i32
    %c0_i32_1 = arith.constant 0 : i32
    return %c0_i32, %c0_i32_0 : i32, i32
  }
  func.func @transform_4(%arg0: i32, %arg1: i32) -> (i32, i32) {
    %c0_i32 = arith.constant 0 : i32
    %c0_i32_0 = arith.constant 0 : i32
    %c0_i32_1 = arith.constant 0 : i32
    return %c0_i32, %c0_i32_0 : i32, i32
  }
  func.func @transform_5(%arg0: i32, %arg1: i32) -> (i32, i32, i32) {
    %c0_i32 = arith.constant 0 : i32
    %c0_i32_0 = arith.constant 0 : i32
    return %arg0, %arg1, %c0_i32 : i32, i32, i32
  }
}

</mosaic_0001>

<llo_original>
// kernel: tpu_custom_call.1
$region0: #{tpu_custom_call.1}
  #allocation0 [shape = 'u32[]', space=smem, size = 0x4, offset = 0x4, fixed_abs, tag = 'smem constant byte address 0x4 - core index']
  #allocation1 [shape = 'u32[144,128]{1,0:T(1,128)}', space=vmem, size = 0x12000, scoped, tag = 'internal scratch']
  %s0 = inlined_call_operand.vmem [shape: f32[2,1], index: 0, kind: input, shape index: {}]
  %s1 = inlined_call_operand.vmem [shape: f32[16,1], index: 1, kind: input, shape index: {}]
  %s2 = inlined_call_operand.vmem [shape: f32[16,1], index: 2, kind: input, shape index: {}]
  %s3 = inlined_call_operand.vmem [shape: f32[16,32], index: 3, kind: input, shape index: {}]
  %s4 = inlined_call_operand.vmem [shape: f32[1,32], index: 4, kind: input, shape index: {}]
  %s5 = inlined_call_operand.hbm [shape: f32[2,16,512], index: 5, kind: output, shape index: {}]
  %s6 = sld [smem:[#allocation0]]
  $region57: #{tpu_custom_call.1} parent=0
    _
  %s8 = ssub.s32 1, %s6
  %s9 = scalar_select 0, %s8, %s6
  $region1: #{tpu_custom_call.1} parent=0
    #allocation2 [shape = 'u8[1024]{0}', space=smem, size = 0x400, scoped, tag = 'input window, operand 0, single buffered']
    #allocation3 [shape = 's32[2]{0}', space=sflag, size = 0x8, scoped, tag = 'scoped memory for tpu_custom_call.1']
    #allocation4 [shape = 's32[2]{0}', space=sflag, size = 0x8, scoped, tag = 'scoped memory for tpu_custom_call.1']
    #allocation5 [shape = 'u8[65536]{0}', space=vmem, size = 0x10000, scoped, tag = 'output window, operand 0']
    %10 = vsyncpa [#allocation4], 0
    %11 = vsyncpa [#allocation3], 0
    %s12 = scalar_lea.sflag [#allocation3], 1
    %13 = vsyncpa %s12, 0
    loop: start=0, step=1, limit=4
    $region2: #{tpu_custom_call.1} parent=1 // loop_pre_header
      _
    $region3: #{tpu_custom_call.1} parent=1 // loop_header
      %s15 = sphi 0, %s19
      %p16 = scmp.ge.s32.totalorder %s15, 4
      %s22 = sphi 0, %s34
      %s23 = sphi 0, %s30
      %s24 = sphi 0, %s22
      %s25 = sphi 0, %s23
      %s26 = sphi 0, %s24
      %s27 = sphi 0, %s25
      %s35 = sphi 0, %s35
      %s37 = sphi 0, %s35
      %s38 = sphi 0, %s37
      %s52 = sphi 0, %s38
      %s56 = sphi 0, %s56
      %s58 = sphi 0, %s56
      %s59 = sphi 0, %s58
      %s73 = sphi 0, %s59
      %s77 = sphi 0, %s77
      %s79 = sphi 0, %s77
      %s80 = sphi 0, %s79
      %s94 = sphi 0, %s80
      %s98 = sphi 0, %s98
      %s100 = sphi 0, %s98
      %s101 = sphi 0, %s100
      %s115 = sphi 0, %s101
      %s119 = sphi 0, %s119
      %s121 = sphi 0, %s119
      %s122 = sphi 0, %s121
      %s136 = sphi 0, %s122
      %s144 = sphi 0, %s146
      %s147 = sphi 0, %s144
      %s148 = sphi 0, %s147
      %s164 = sphi 0, %s148
    $region4: #{tpu_custom_call.1} parent=1 // loop_header_branch
      %18 = sbr.rel (%p16) target = $region8
    $region5: #{tpu_custom_call.1} parent=1 // loop_body
      %s20 = ssub.s32 %s15, 1
      %s21 = ssub.s32 %s15, 2
      %s28 = sadd.s32 1, %s23
      %p29 = scmp.ge.s32.totalorder %s28, 1
      %s30 = scalar_select %p29, 0, %s28
      %s31 = sadd.s32 1, %s22
      %s32 = scalar_select %p29, %s31, %s22
      %p33 = scmp.ge.s32.totalorder %s32, 2
      %s34 = scalar_select %p33, 0, %s32
      %s36 = sadd.s32 %s35, 1
      %p39 = scmp.eq.s32.totalorder %s15, 1
      %p40 = scmp.ne.s32.totalorder %s35, %s37
      %p41 = scmp.eq.s32.totalorder %s15, 0
      %p42 = por %p40, %p41
      %p43 = scmp.ne.s32.totalorder %s35, %s37
      %p44 = scmp.eq.s32.totalorder %s20, 1
      %p45 = por %p43, %p44
      %p46 = scmp.ne.s32.totalorder %s37, %s38
      %p47 = scmp.eq.s32.totalorder %s20, 0
      %p48 = por %p46, %p47
      %p49 = scmp.ne.s32.totalorder %s37, %s38
      %p50 = scmp.eq.s32.totalorder %s21, 1
      %p51 = por %p49, %p50
      %p53 = scmp.ne.s32.totalorder %s38, %s52
      %p54 = scmp.eq.s32.totalorder %s21, 0
      %p55 = por %p53, %p54
      %s57 = sadd.s32 %s56, 1
      %p60 = scmp.eq.s32.totalorder %s15, 1
      %p61 = scmp.ne.s32.totalorder %s56, %s58
      %p62 = scmp.eq.s32.totalorder %s15, 0
      %p63 = por %p61, %p62
      %p64 = scmp.ne.s32.totalorder %s56, %s58
      %p65 = scmp.eq.s32.totalorder %s20, 1
      %p66 = por %p64, %p65
      %p67 = scmp.ne.s32.totalorder %s58, %s59
      %p68 = scmp.eq.s32.totalorder %s20, 0
      %p69 = por %p67, %p68
      %p70 = scmp.ne.s32.totalorder %s58, %s59
      %p71 = scmp.eq.s32.totalorder %s21, 1
      %p72 = por %p70, %p71
      %p74 = scmp.ne.s32.totalorder %s59, %s73
      %p75 = scmp.eq.s32.totalorder %s21, 0
      %p76 = por %p74, %p75
      %s78 = sadd.s32 %s77, 1
      %p81 = scmp.eq.s32.totalorder %s15, 1
      %p82 = scmp.ne.s32.totalorder %s77, %s79
      %p83 = scmp.eq.s32.totalorder %s15, 0
      %p84 = por %p82, %p83
      %p85 = scmp.ne.s32.totalorder %s77, %s79
      %p86 = scmp.eq.s32.totalorder %s20, 1
      %p87 = por %p85, %p86
      %p88 = scmp.ne.s32.totalorder %s79, %s80
      %p89 = scmp.eq.s32.totalorder %s20, 0
      %p90 = por %p88, %p89
      %p91 = scmp.ne.s32.totalorder %s79, %s80
      %p92 = scmp.eq.s32.totalorder %s21, 1
      %p93 = por %p91, %p92
      %p95 = scmp.ne.s32.totalorder %s80, %s94
      %p96 = scmp.eq.s32.totalorder %s21, 0
      %p97 = por %p95, %p96
      %s99 = sadd.s32 %s98, 1
      %p102 = scmp.eq.s32.totalorder %s15, 1
      %p103 = scmp.ne.s32.totalorder %s98, %s100
      %p104 = scmp.eq.s32.totalorder %s15, 0
      %p105 = por %p103, %p104
      %p106 = scmp.ne.s32.totalorder %s98, %s100
      %p107 = scmp.eq.s32.totalorder %s20, 1
      %p108 = por %p106, %p107
      %p109 = scmp.ne.s32.totalorder %s100, %s101
      %p110 = scmp.eq.s32.totalorder %s20, 0
      %p111 = por %p109, %p110
      %p112 = scmp.ne.s32.totalorder %s100, %s101
      %p113 = scmp.eq.s32.totalorder %s21, 1
      %p114 = por %p112, %p113
      %p116 = scmp.ne.s32.totalorder %s101, %s115
      %p117 = scmp.eq.s32.totalorder %s21, 0
      %p118 = por %p116, %p117
      %s120 = sadd.s32 %s119, 1
      %p123 = scmp.eq.s32.totalorder %s15, 1
      %p124 = scmp.ne.s32.totalorder %s119, %s121
      %p125 = scmp.eq.s32.totalorder %s15, 0
      %p126 = por %p124, %p125
      %p127 = scmp.ne.s32.totalorder %s119, %s121
      %p128 = scmp.eq.s32.totalorder %s20, 1
      %p129 = por %p127, %p128
      %p130 = scmp.ne.s32.totalorder %s121, %s122
      %p131 = scmp.eq.s32.totalorder %s20, 0
      %p132 = por %p130, %p131
      %p133 = scmp.ne.s32.totalorder %s121, %s122
      %p134 = scmp.eq.s32.totalorder %s21, 1
      %p135 = por %p133, %p134
      %p137 = scmp.ne.s32.totalorder %s122, %s136
      %p138 = scmp.eq.s32.totalorder %s21, 0
      %p139 = por %p137, %p138
      %s140 = ssub.s32 %s22, %s34
      %s141 = ssub.s32 %s23, %s30
      %s142 = sor.u32 %s140, %s141
      %p143 = scmp.eq.s32.totalorder %s142, 0
      %s145 = sadd.s32 %s144, 1
      %s146 = scalar_select %p143, %s144, %s145
      %p149 = pneg %p143
      %p150 = scmp.eq.s32.totalorder %s15, 1
      %p151 = por %p149, %p150
      %p152 = scmp.ne.s32.totalorder %s144, %s147
      %p153 = scmp.eq.s32.totalorder %s15, 0
      %p154 = por %p152, %p153
      %p155 = scmp.ne.s32.totalorder %s144, %s147
      %p156 = scmp.eq.s32.totalorder %s20, 1
      %p157 = por %p155, %p156
      %p158 = scmp.ne.s32.totalorder %s147, %s148
      %p159 = scmp.eq.s32.totalorder %s20, 0
      %p160 = por %p158, %p159
      %p161 = scmp.ne.s32.totalorder %s147, %s148
      %p162 = scmp.eq.s32.totalorder %s21, 1
      %p163 = por %p161, %p162
      %p165 = scmp.ne.s32.totalorder %s148, %s164
      %p166 = scmp.eq.s32.totalorder %s21, 0
      %p167 = por %p165, %p166
      %p168 = scmp.le.s32.totalorder 1, %s15
      %p169 = scmp.lt.s32.totalorder %s15, 3
      %p170 = pnand %p168, %p169
      %p171 = pneg %p170
      // Predicated region
      $region9: #{tpu_custom_call.1} parent=5 // pred_check
        _
      $region10: #{tpu_custom_call.1} parent=5 // pred_check_branch
        %173 = sbr.rel (%p170) target = $region12
      $region11: #{tpu_custom_call.1} parent=5 // pred_region
        %s174 = ssub.s32 %s15, 1
        // Predicated region
        $region13: #{tpu_custom_call.1} parent=11 // pred_check
          %p175 = pneg %p48
        $region14: #{tpu_custom_call.1} parent=11 // pred_check_branch
          %177 = sbr.rel (%p175) target = $region16
        $region15: #{tpu_custom_call.1} parent=11 // pred_region
          %s179 = ssub.s32 32, 32
          %180 = vsyncadd [#allocation4], %s179
          %s182 = sshll.u32 %s0, 4
          %s183 = int_to_ptr.vmem [resolvable:$true] %s182
          %185 = dma.vmem_to_smem %s183, 32, [#allocation2], [#allocation4]
        $region16: #{tpu_custom_call.1} parent=11 // pred_fallthru
          _
        // Predicated region
        $region17: #{tpu_custom_call.1} parent=11 // pred_check
          %p186 = pneg %p69
        $region18: #{tpu_custom_call.1} parent=11 // pred_check_branch
          %188 = sbr.rel (%p186) target = $region20
        $region19: #{tpu_custom_call.1} parent=11 // pred_region
          _
        $region20: #{tpu_custom_call.1} parent=11 // pred_fallthru
          _
        // Predicated region
        $region21: #{tpu_custom_call.1} parent=11 // pred_check
          %p189 = pneg %p90
        $region22: #{tpu_custom_call.1} parent=11 // pred_check_branch
          %191 = sbr.rel (%p189) target = $region24
        $region23: #{tpu_custom_call.1} parent=11 // pred_region
          _
        $region24: #{tpu_custom_call.1} parent=11 // pred_fallthru
          _
        // Predicated region
        $region25: #{tpu_custom_call.1} parent=11 // pred_check
          %p192 = pneg %p111
        $region26: #{tpu_custom_call.1} parent=11 // pred_check_branch
          %194 = sbr.rel (%p192) target = $region28
        $region27: #{tpu_custom_call.1} parent=11 // pred_region
          _
        $region28: #{tpu_custom_call.1} parent=11 // pred_fallthru
          _
        // Predicated region
        $region29: #{tpu_custom_call.1} parent=11 // pred_check
          %p195 = pneg %p132
        $region30: #{tpu_custom_call.1} parent=11 // pred_check_branch
          %197 = sbr.rel (%p195) target = $region32
        $region31: #{tpu_custom_call.1} parent=11 // pred_region
          _
        $region32: #{tpu_custom_call.1} parent=11 // pred_fallthru
          _
      $region12: #{tpu_custom_call.1} parent=5 // pred_fallthru
        _
      %p198 = scmp.lt.s32.totalorder %s15, 2
      // Predicated region
      $region33: #{tpu_custom_call.1} parent=5 // pred_check
        %p199 = pneg %p198
      $region34: #{tpu_custom_call.1} parent=5 // pred_check_branch
        %201 = sbr.rel (%p199) target = $region36
      $region35: #{tpu_custom_call.1} parent=5 // pred_region
        _
      $region36: #{tpu_custom_call.1} parent=5 // pred_fallthru
        _
      %p202 = scmp.le.s32.totalorder 1, %s15
      %p203 = scmp.lt.s32.totalorder %s15, 3
      %p204 = pnand %p202, %p203
      %p205 = pneg %p204
      // Predicated region
      $region37: #{tpu_custom_call.1} parent=5 // pred_check
        _
      $region38: #{tpu_custom_call.1} parent=5 // pred_check_branch
        %207 = sbr.rel (%p204) target = $region40
      $region39: #{tpu_custom_call.1} parent=5 // pred_region
        %s208 = ssub.s32 %s15, 1
        // Predicated region
        $region41: #{tpu_custom_call.1} parent=39 // pred_check
          %p209 = pneg %p48
        $region42: #{tpu_custom_call.1} parent=39 // pred_check_branch
          %211 = sbr.rel (%p209) target = $region44
        $region43: #{tpu_custom_call.1} parent=39 // pred_region
          %212 = dma.done [#allocation4], 32
        $region44: #{tpu_custom_call.1} parent=39 // pred_fallthru
          _
        %213 = sfence
        %p214 = pneg %p48
        %p215 = pneg %p45
        %p216 = pneg %p69
        %p217 = pneg %p66
        %p218 = pneg %p90
        %p219 = pneg %p87
        %p220 = pneg %p111
        %p221 = pneg %p108
        %p222 = pneg %p132
        %p223 = pneg %p129
        %p224 = pneg %p160
        %p225 = pneg %p157
        %s226 = sand.u32 %s147, 1
        %s227 = scalar_lea.sflag [#allocation3], %s226
        %s228 = sand.u32 %s147, 1
        %s229 = smul.addr %s228, 64
        %s230 = scalar_lea.vmem [#allocation5], %s229
        %s231 = smul.u32 2, %s25
        %s232 = smul.u32 %s24, 128
        %s233 = sld [smem:[#allocation2 + %s232]]
        %v234 = vld [vmem:[%s1] sm:$0xff]
        %v235 = vld [vmem:[%s1 + $0x8] sm:$0xff]
        %v236 = vstv %s233
        %v237 = vmul.f32 %v236, %v234
        %v238 = vmul.f32 %v236, %v235
        %v239 = vld [vmem:[%s2] sm:$0xff]
        %v240 = vld [vmem:[%s2 + $0x8] sm:$0xff]
        %v241 = vadd.f32 %v237, %v239
        %v242 = vadd.f32 %v238, %v240
        %v243 = vmax.f32 %v241, 0.0
        %v244 = vmax.f32 %v242, 0.0
        %v245 = vld [vmem:[%s3] sm:$0xff]
        %v246 = vld [vmem:[%s3 + $0x8] sm:$0xff]
        %248 = vset.pattern.permute.xlu0 0
        %249 = vperm.xlu0 %248, %v243
        %v250 = vpop.permute.xlu0 %249
        %253 = vset.pattern.permute.xlu0 0
        %254 = vperm.xlu0 %253, %v244
        %v255 = vpop.permute.xlu0 %254
        %v257 = vmul.f32 %v250, %v245
        %v258 = vmul.f32 %v255, %v246
        %vm259 = vcmask 261120
        %v260 = vsel %vm259, %v257, 0.0
        %v261 = vsel %vm259, %v258, 0.0
        %v262 = vadd.f32 %v260, %v261
        %v263 = vrot.slane %v262, 4
        %v264 = vadd.f32 %v262, %v263
        %v265 = vrot.slane %v264, 2
        %v266 = vadd.f32 %v264, %v265
        %v267 = vrot.slane %v266, 1
        %v268 = vadd.f32 %v266, %v267
        %v269 = vld [vmem:[%s4] sm:$0x1]
        %v270 = vadd.f32 %v268, %v269
        %272 = vrot.lane.b32.xlu0 %v270, 32
        %v273 = vpop.permute.xlu0 %272
        %275 = vrot.lane.b32.xlu0 %v270, 64
        %v276 = vpop.permute.xlu0 %275
        %278 = vrot.lane.b32.xlu0 %v270, 96
        %v279 = vpop.permute.xlu0 %278
        %v281 = vsel %vm259, %v270, %v273
        %vm282 = vcmask 523264
        %v283 = vsel %vm282, %v281, %v276
        %vm284 = vcmask 785408
        %v285 = vsel %vm284, %v283, %v279
        %v286 = vlaneseq
        %v287 = vshrl.u32 %v286, 7
        %v288 = vsub.s32 0, %v287
        %v289 = vrot.slane %v285, %v288
        %290 = vst [vmem:[%s230] sm:$0xff] %v289
        %291 = vst [vmem:[%s230 + $0x8] sm:$0xff] %v289
        %292 = vst [vmem:[%s230 + $0x10] sm:$0xff] %v289
        %293 = vst [vmem:[%s230 + $0x18] sm:$0xff] %v289
        %294 = vst [vmem:[%s230 + $0x20] sm:$0xff] %v289
        %295 = vst [vmem:[%s230 + $0x28] sm:$0xff] %v289
        %296 = vst [vmem:[%s230 + $0x30] sm:$0xff] %v289
        %297 = vst [vmem:[%s230 + $0x38] sm:$0xff] %v289
        %s298 = sand.u32 %s147, 1
        %s299 = scalar_lea.sflag [#allocation3], %s298
        %s300 = sand.u32 %s147, 1
        %s301 = smul.addr %s300, 64
        %s302 = scalar_lea.vmem [#allocation5], %s301
        // Predicated region
        $region45: #{tpu_custom_call.1} parent=39 // pred_check
          %p303 = pneg %p157
        $region46: #{tpu_custom_call.1} parent=39 // pred_check_branch
          %305 = sbr.rel (%p303) target = $region48
        $region47: #{tpu_custom_call.1} parent=39 // pred_region
          %s306 = smul.u32 2, %s25
          %s308 = ssub.s32 1024, 1024
          %309 = vsyncadd %s299, %s308
          %s310 = smul.addr %s306, 4
          %s311 = smul.addr %s24, 8
          %s312 = sadd.s32 %s310, %s311
          %s313 = smul.addr %s312, 128
          %s314 = scalar_lea.hbm %s5, %s313
          %s315 = sshll.u32 %s302, 4
          %s316 = int_to_ptr.vmem [resolvable:$true] %s315
          %321 = dma.vmem_to_hbm [thread:$0]  %s316, 1024, %s314, %s299, 512, 512, 32
        $region48: #{tpu_custom_call.1} parent=39 // pred_fallthru
          _
      $region40: #{tpu_custom_call.1} parent=5 // pred_fallthru
        _
      %p322 = scmp.le.s32.totalorder 2, %s15
      // Predicated region
      $region49: #{tpu_custom_call.1} parent=5 // pred_check
        %p323 = pneg %p322
      $region50: #{tpu_custom_call.1} parent=5 // pred_check_branch
        %325 = sbr.rel (%p323) target = $region52
      $region51: #{tpu_custom_call.1} parent=5 // pred_region
        %s326 = ssub.s32 %s15, 2
        // Predicated region
        $region53: #{tpu_custom_call.1} parent=51 // pred_check
          %p327 = pneg %p163
        $region54: #{tpu_custom_call.1} parent=51 // pred_check_branch
          %329 = sbr.rel (%p327) target = $region56
        $region55: #{tpu_custom_call.1} parent=51 // pred_region
          %s330 = sand.u32 %s148, 1
          %s331 = scalar_lea.sflag [#allocation3], %s330
          %s332 = sand.u32 %s148, 1
          %s333 = smul.addr %s332, 64
          %s334 = scalar_lea.vmem [#allocation5], %s333
          %335 = dma.done %s331, 1024
        $region56: #{tpu_custom_call.1} parent=51 // pred_fallthru
          _
      $region52: #{tpu_custom_call.1} parent=5 // pred_fallthru
        _
    $region6: #{tpu_custom_call.1} parent=1 // loop_footer
      %s19 = sadd.s32 1, %s15
    $region7: #{tpu_custom_call.1} parent=1 // loop_footer_branch
      %14 = sbr.rel target = $region3
    $region8: #{tpu_custom_call.1} parent=1 // loop_exit
      _
    %336 = vsyncpa [#allocation3], 1
    %s337 = scalar_lea.sflag [#allocation3], 1
    %338 = vsyncpa %s337, 1
    %339 = vsyncpa [#allocation4], 1
    %s340 = scalar_lea.sflag [#allocation4], 1
    %341 = vsyncpa %s340, 1

</llo_original>
